<compile_context>
chip_gen: v6e
topology: v6e:2x2x1
jax: 0.10.0
libtpu: 0.0.40
codegen_flags: <defaults>
</compile_context>

<pallas_src>
import jax
import jax.numpy as jnp
from jax.experimental import pallas as pl
from jax.experimental.pallas import tpu as pltpu

SMOOTH = 1e-5
LANE = 128


def _cdiv(a, b):
    return -(-a // b)


def _largest_divisor_leq(n, cap):
    cap = max(1, min(n, cap))
    for d in range(cap, 0, -1):
        if n % d == 0:
            return d
    return 1


def _chip_config():
    """Per-generation grid / VMEM-budget choices (conservative fallback)."""
    kind = ""
    try:
        kind = jax.devices()[0].device_kind.lower()
    except Exception:
        pass
    if ("v7" in kind) or ("7x" in kind):
        # v7x: 2 TensorCores share the HBM stream; only 64 MiB physical VMEM
        # per TC -> modest per-core input-buffer budget, 3-deep buffering to
        # hide the fixed per-step overhead at 3.2 TB/s.
        return dict(cores=2, budget=8 << 20, buffers=3, vmem_limit=None)
    if "v6" in kind:
        # v6e: single TC, 128 MiB physical VMEM -> bigger tiles, raised limit.
        return dict(cores=1, budget=20 << 20, buffers=2, vmem_limit=64 << 20)
    # v5e / unknown: single TC, 16 MiB scoped default -> stay conservative.
    return dict(cores=1, budget=8 << 20, buffers=2, vmem_limit=None)


def _make_kernel(rows_total, rows_per_tile, full_blocks, needs_mask):
    def kernel(p_ref, t_ref, isum_ref, ptsum_ref, iacc, ptacc):
        k = pl.program_id(2)

        @pl.when(k == 0)
        def _():
            iacc[...] = jnp.zeros_like(iacc)
            ptacc[...] = jnp.zeros_like(ptacc)

        # Inputs stream in their native dtype (f32 / bf16 / int8); the f32
        # cast happens per tile on the VPU.
        p = p_ref[...].astype(jnp.float32)
        t = t_ref[...].astype(jnp.float32)
        inter = p * t
        both = p + t  # sum(p) + sum(t) fused as sum(p + t)

        if needs_mask:
            # Logical rows-block index of this step.
            blk = pl.program_id(0) * pl.num_programs(2) + k
            is_tail = blk >= full_blocks

            @pl.when(blk < full_blocks)
            def _():  # full, in-range tile: no mask cost.
                iacc[...] += jnp.sum(inter, axis=1)
                ptacc[...] += jnp.sum(both, axis=1)

            @pl.when(is_tail)
            def _():  # ragged tail / clamped re-read tile: mask invalid rows.
                row = blk * rows_per_tile + jax.lax.broadcasted_iota(
                    jnp.int32, inter.shape, 1)
                valid = row < rows_total
                iacc[...] += jnp.sum(jnp.where(valid, inter, 0.0), axis=1)
                ptacc[...] += jnp.sum(jnp.where(valid, both, 0.0), axis=1)
        else:
            iacc[...] += jnp.sum(inter, axis=1)
            ptacc[...] += jnp.sum(both, axis=1)

        @pl.when(k == pl.num_programs(2) - 1)
        def _():  # single lane-wise writeback per output block.
            isum_ref[0, 0] = iacc[...]
            ptsum_ref[0, 0] = ptacc[...]

    return kernel


def binary_dice_loss(predict, target, *, _max_rows_per_tile=None):
    """predict, target: any shape with leading batch dim N (e.g. NCHW)."""
    n = predict.shape[0]
    p = predict.reshape(n, -1)
    t = target.reshape(n, -1)

    # Stream binary / bool masks as 1-byte int8 (cast to f32 inside the
    # kernel) instead of upcasting to f32 in the wrapper.
    if p.dtype == jnp.bool_:
        p = p.astype(jnp.int8)
    if t.dtype == jnp.bool_:
        t = t.astype(jnp.int8)
    d = p.shape[1]

    # Rare fallback: pad the tail so D is a lane multiple (zeros are
    # sum-neutral).  Typical C*H*W inputs do not take this branch.
    # TODO(synk): replace with an in-kernel lane mask on the last column
    # block to avoid the full-array pad copy when D % 128 != 0.
    if d % LANE != 0:
        pad = LANE - d % LANE
        p = jnp.pad(p, ((0, 0), (0, pad)))
        t = jnp.pad(t, ((0, 0), (0, pad)))
        d += pad

    rows_total = d // LANE
    p3 = p.reshape(n, rows_total, LANE)  # free row-major reshape
    t3 = t.reshape(n, rows_total, LANE)

    cfg = _chip_config()
    budget, buffers = cfg["budget"], cfg["buffers"]

    # Sublane granularity of the rows (second-minor) block dim:
    # (8,128) f32, (16,128) bf16, (32,128) int8.
    itemsizes = (p3.dtype.itemsize, t3.dtype.itemsize)
    sub_mult = max(8, 32 // min(itemsizes))
    itemsum = sum(itemsizes)

    # Batch tiling: cap the leading block dim so (2 inputs x `buffers`
    # pipeline buffers) stays inside the per-chip VMEM budget for any N.
    rows_for_sizing = min(max(rows_total, 1), 512)
    n_tile_cap = max(1, budget // (buffers * rows_for_sizing * LANE * itemsum))
    n_tile = _largest_divisor_leq(n, n_tile_cap)
    n_b = n // n_tile

    rows_cap = budget // (buffers * n_tile * LANE * itemsum)
    rows_cap = max(sub_mult, min(1024, (rows_cap // sub_mult) * sub_mult))
    if _max_rows_per_tile is not None:  # test hook (forces multi-tile paths)
        rows_cap = max(sub_mult,
                       (min(rows_cap, _max_rows_per_tile) // sub_mult) * sub_mult)
    rows_per_tile = rows_total if rows_total <= rows_cap else rows_cap

    n_blocks = _cdiv(rows_total, rows_per_tile)
    full_blocks = rows_total // rows_per_tile

    # Outer split only where there is a second TensorCore to feed (v7x).
    n_outer = 2 if (cfg["cores"] == 2 and n_blocks >= 2) else 1
    k_inner = _cdiv(n_blocks, n_outer)
    needs_mask = n_outer * k_inner > full_blocks

    if n_outer * k_inner == n_blocks:
        in_map = lambda o, b, k: (b, o * k_inner + k, 0)
    else:
        # Fully out-of-range steps are clamped onto the last real block and
        # zeroed by the in-kernel row mask.
        in_map = lambda o, b, k: (b, jnp.minimum(o * k_inner + k, n_blocks - 1), 0)
    out_map = lambda o, b, k: (o, b, 0, 0)

    use_buf3 = buffers >= 3 and n_blocks > 2
    kernel = _make_kernel(rows_total, rows_per_tile, full_blocks, needs_mask)
    out_shape = (
        jax.ShapeDtypeStruct((n_outer, n_b, n_tile, LANE), jnp.float32),
        jax.ShapeDtypeStruct((n_outer, n_b, n_tile, LANE), jnp.float32),
    )

    def run(dim_sems, buffered):
        spec_kwargs = {"pipeline_mode": pl.Buffered(3)} if buffered else {}
        in_specs = [
            pl.BlockSpec((n_tile, rows_per_tile, LANE), in_map, **spec_kwargs),
            pl.BlockSpec((n_tile, rows_per_tile, LANE), in_map, **spec_kwargs),
        ]
        out_specs = [
            pl.BlockSpec((1, 1, n_tile, LANE), out_map),
            pl.BlockSpec((1, 1, n_tile, LANE), out_map),
        ]
        cp_kwargs = {"dimension_semantics": dim_sems}
        if cfg["vmem_limit"] is not None:
            cp_kwargs["vmem_limit_bytes"] = cfg["vmem_limit"]
        return pl.pallas_call(
            kernel,
            out_shape=out_shape,
            grid_spec=pltpu.PrefetchScalarGridSpec(
                num_scalar_prefetch=0,
                grid=(n_outer, n_b, k_inner),
                in_specs=in_specs,
                out_specs=out_specs,
                scratch_shapes=[
                    pltpu.VMEM((n_tile, LANE), jnp.float32),
                    pltpu.VMEM((n_tile, LANE), jnp.float32),
                ],
            ),
            compiler_params=pltpu.CompilerParams(**cp_kwargs),
        )(p3, t3)

    safe_sems = ("arbitrary", "arbitrary", "arbitrary")
    if n_outer == 2:
        # Only CORE_PARALLEL guarantees the outer axis is actually split
        # across v7x's two TensorCores; fall back to the safe config if the
        # toolchain rejects it.
        try:
            isum, ptsum = run(
                (pltpu.CORE_PARALLEL, pltpu.ARBITRARY, pltpu.ARBITRARY), use_buf3)
        except Exception:
            isum, ptsum = run(safe_sems, False)
    else:
        isum, ptsum = run(safe_sems, use_buf3)

    # Tiny epilogue in JAX: cross-lane / cross-core reduction + dice.
    inter = jnp.sum(isum, axis=(0, 3)).reshape(n)
    denom = jnp.sum(ptsum, axis=(0, 3)).reshape(n)
    dice = (2.0 * inter + SMOOTH) / (denom + SMOOTH)
    return 1.0 - jnp.sum(dice) / n


def _reference(predict, target):
    n = predict.shape[0]
    p = predict.reshape(n, -1).astype(jnp.float32)
    t = target.reshape(n, -1).astype(jnp.float32)
    inter = jnp.sum(p * t, axis=1)
    dice = (2.0 * inter + SMOOTH) / (
        jnp.sum(p, axis=1) + jnp.sum(t, axis=1) + SMOOTH)
    return 1.0 - jnp.sum(dice) / n


if __name__ == "__main__":
    key = jax.random.PRNGKey(0)
    k1, k2, k3, k4 = jax.random.split(key, 4)

    # Main case: N=2, C=4, H=W=16 (NCHW), float predictions + float mask.
    predict = jax.nn.sigmoid(jax.random.normal(k1, (2, 4, 16, 16), jnp.float32))
    target = (jax.random.uniform(k2, (2, 4, 16, 16)) > 0.5).astype(jnp.float32)
    loss = binary_dice_loss(predict, target)
    jax.block_until_ready(loss)
    ref = _reference(predict, target)
    assert jnp.allclose(loss, ref, atol=1e-5, rtol=1e-5), (loss, ref)

    # Boolean mask target -> streamed as int8, cast to f32 inside the kernel.
    target_b = jax.random.uniform(k2, (2, 4, 16, 16)) > 0.5
    loss_b = binary_dice_loss(predict, target_b)
    jax.block_until_ready(loss_b)
    ref_b = _reference(predict, target_b)
    assert jnp.allclose(loss_b, ref_b, atol=1e-5, rtol=1e-5), (loss_b, ref_b)

    # Multi-tile reduction with a ragged, masked tail (forced small tile).
    pr = jax.nn.sigmoid(jax.random.normal(k3, (2, 9, 128), jnp.float32))
    tg = (jax.random.uniform(k4, (2, 9, 128)) > 0.5).astype(jnp.float32)
    loss_m = binary_dice_loss(pr, tg, _max_rows_per_tile=8)
    jax.block_until_ready(loss_m)
    ref_m = _reference(pr, tg)
    assert jnp.allclose(loss_m, ref_m, atol=1e-5, rtol=1e-5), (loss_m, ref_m)

    print("KERNEL_OK")
</pallas_src>

<mosaic_0001>
module attributes {stable_mosaic.version = 11 : i64} {
  func.func @kernel(%arg0: i32, %arg1: i32, %arg2: i32, %arg3: memref<2x8x128xf32, #tpu.memory_space<vmem>>, %arg4: memref<2x8x128xf32, #tpu.memory_space<vmem>>, %arg5: memref<1x1x2x128xf32, #tpu.memory_space<vmem>>, %arg6: memref<1x1x2x128xf32, #tpu.memory_space<vmem>>, %arg7: memref<2x128xf32, #tpu.memory_space<vmem>>, %arg8: memref<2x128xf32, #tpu.memory_space<vmem>>) attributes {dimension_semantics = [#tpu.dimension_semantics<arbitrary>, #tpu.dimension_semantics<arbitrary>, #tpu.dimension_semantics<arbitrary>], iteration_bounds = array<i64: 1, 1, 1>, scalar_prefetch = 0 : i64, scratch_operands = 2 : i64, tpu.core_type = #tpu.core_type<tc>, window_params = [{transform_indices = @transform_0, window_bounds = array<i64: 2, 8, 128>}, {transform_indices = @transform_1, window_bounds = array<i64: 2, 8, 128>}, {transform_indices = @transform_2, window_bounds = array<i64: 1, 1, 2, 128>}, {transform_indices = @transform_3, window_bounds = array<i64: 1, 1, 2, 128>}]} {
    %c0_i32 = arith.constant 0 : i32
    %0 = arith.cmpi eq, %arg2, %c0_i32 : i32
    %1 = arith.extui %0 : i1 to i32
    %c0_i32_0 = arith.constant 0 : i32
    %2 = arith.cmpi ne, %1, %c0_i32_0 : i32
    scf.if %2 {
      %cst_17 = arith.constant 0.000000e+00 : f32
      %18 = vector.broadcast %cst_17 : f32 to vector<2x128xf32>
      %c0_18 = arith.constant 0 : index
      %c0_19 = arith.constant 0 : index
      %19 = vector.load %arg7[%c0_18, %c0_19] : memref<2x128xf32, #tpu.memory_space<vmem>>, vector<2x128xf32>
      tpu.vector_store %arg7[%c0_18, %c0_19], %18 {strides = array<i32>} : memref<2x128xf32, #tpu.memory_space<vmem>>, vector<2x128xf32>,
      %cst_20 = arith.constant 0.000000e+00 : f32
      %20 = vector.broadcast %cst_20 : f32 to vector<2x128xf32>
      %c0_21 = arith.constant 0 : index
      %c0_22 = arith.constant 0 : index
      %21 = vector.load %arg8[%c0_21, %c0_22] : memref<2x128xf32, #tpu.memory_space<vmem>>, vector<2x128xf32>
      tpu.vector_store %arg8[%c0_21, %c0_22], %20 {strides = array<i32>} : memref<2x128xf32, #tpu.memory_space<vmem>>, vector<2x128xf32>,
    } else {
    }
    %c0 = arith.constant 0 : index
    %c0_1 = arith.constant 0 : index
    %c0_2 = arith.constant 0 : index
    %3 = vector.load %arg3[%c0, %c0_1, %c0_2] : memref<2x8x128xf32, #tpu.memory_space<vmem>>, vector<2x8x128xf32>
    %c0_3 = arith.constant 0 : index
    %c0_4 = arith.constant 0 : index
    %c0_5 = arith.constant 0 : index
    %4 = vector.load %arg4[%c0_3, %c0_4, %c0_5] : memref<2x8x128xf32, #tpu.memory_space<vmem>>, vector<2x8x128xf32>
    %5 = arith.mulf %3, %4 : vector<2x8x128xf32>
    %6 = arith.addf %3, %4 : vector<2x8x128xf32>
    %c0_6 = arith.constant 0 : index
    %c0_7 = arith.constant 0 : index
    %7 = vector.load %arg7[%c0_6, %c0_7] : memref<2x128xf32, #tpu.memory_space<vmem>>, vector<2x128xf32>
    %cst = arith.constant dense<0.000000e+00> : vector<2x128xf32>
    %8 = vector.multi_reduction <add>, %5, %cst [1] : vector<2x8x128xf32> to vector<2x128xf32>
    %9 = arith.addf %7, %8 : vector<2x128xf32>
    %c0_8 = arith.constant 0 : index
    %c0_9 = arith.constant 0 : index
    %10 = vector.load %arg7[%c0_8, %c0_9] : memref<2x128xf32, #tpu.memory_space<vmem>>, vector<2x128xf32>
    tpu.vector_store %arg7[%c0_8, %c0_9], %9 {strides = array<i32>} : memref<2x128xf32, #tpu.memory_space<vmem>>, vector<2x128xf32>,
    %c0_10 = arith.constant 0 : index
    %c0_11 = arith.constant 0 : index
    %11 = vector.load %arg8[%c0_10, %c0_11] : memref<2x128xf32, #tpu.memory_space<vmem>>, vector<2x128xf32>
    %cst_12 = arith.constant dense<0.000000e+00> : vector<2x128xf32>
    %12 = vector.multi_reduction <add>, %6, %cst_12 [1] : vector<2x8x128xf32> to vector<2x128xf32>
    %13 = arith.addf %11, %12 : vector<2x128xf32>
    %c0_13 = arith.constant 0 : index
    %c0_14 = arith.constant 0 : index
    %14 = vector.load %arg8[%c0_13, %c0_14] : memref<2x128xf32, #tpu.memory_space<vmem>>, vector<2x128xf32>
    tpu.vector_store %arg8[%c0_13, %c0_14], %13 {strides = array<i32>} : memref<2x128xf32, #tpu.memory_space<vmem>>, vector<2x128xf32>,
    %c0_i32_15 = arith.constant 0 : i32
    %15 = arith.cmpi eq, %arg2, %c0_i32_15 : i32
    %16 = arith.extui %15 : i1 to i32
    %c0_i32_16 = arith.constant 0 : i32
    %17 = arith.cmpi ne, %16, %c0_i32_16 : i32
    scf.if %17 {
      %c0_17 = arith.constant 0 : index
      %c0_18 = arith.constant 0 : index
      %18 = vector.load %arg7[%c0_17, %c0_18] : memref<2x128xf32, #tpu.memory_space<vmem>>, vector<2x128xf32>
      %c0_19 = arith.constant 0 : index
      %c0_20 = arith.constant 0 : index
      %c0_21 = arith.constant 0 : index
      %c0_22 = arith.constant 0 : index
      %19 = vector.load %arg5[%c0_19, %c0_20, %c0_21, %c0_22] : memref<1x1x2x128xf32, #tpu.memory_space<vmem>>, vector<1x1x2x128xf32>
      %20 = vector.shape_cast %19 : vector<1x1x2x128xf32> to vector<2x128xf32>
      %21 = vector.shape_cast %18 : vector<2x128xf32> to vector<1x1x2x128xf32>
      tpu.vector_store %arg5[%c0_19, %c0_20, %c0_21, %c0_22], %21 {strides = array<i32>} : memref<1x1x2x128xf32, #tpu.memory_space<vmem>>, vector<1x1x2x128xf32>,
      %c0_23 = arith.constant 0 : index
      %c0_24 = arith.constant 0 : index
      %22 = vector.load %arg8[%c0_23, %c0_24] : memref<2x128xf32, #tpu.memory_space<vmem>>, vector<2x128xf32>
      %c0_25 = arith.constant 0 : index
      %c0_26 = arith.constant 0 : index
      %c0_27 = arith.constant 0 : index
      %c0_28 = arith.constant 0 : index
      %23 = vector.load %arg6[%c0_25, %c0_26, %c0_27, %c0_28] : memref<1x1x2x128xf32, #tpu.memory_space<vmem>>, vector<1x1x2x128xf32>
      %24 = vector.shape_cast %23 : vector<1x1x2x128xf32> to vector<2x128xf32>
      %25 = vector.shape_cast %22 : vector<2x128xf32> to vector<1x1x2x128xf32>
      tpu.vector_store %arg6[%c0_25, %c0_26, %c0_27, %c0_28], %25 {strides = array<i32>} : memref<1x1x2x128xf32, #tpu.memory_space<vmem>>, vector<1x1x2x128xf32>,
    } else {
    }
    return
  }
  func.func @transform_0(%arg0: i32, %arg1: i32, %arg2: i32) -> (i32, i32, i32) {
    %c1_i32 = arith.constant 1 : i32
    %0 = arith.muli %arg0, %c1_i32 : i32
    %1 = arith.addi %0, %arg2 : i32
    %c0_i32 = arith.constant 0 : i32
    %c0_i32_0 = arith.constant 0 : i32
    return %arg1, %1, %c0_i32 : i32, i32, i32
  }
  func.func @transform_1(%arg0: i32, %arg1: i32, %arg2: i32) -> (i32, i32, i32) {
    %c1_i32 = arith.constant 1 : i32
    %0 = arith.muli %arg0, %c1_i32 : i32
    %1 = arith.addi %0, %arg2 : i32
    %c0_i32 = arith.constant 0 : i32
    %c0_i32_0 = arith.constant 0 : i32
    return %arg1, %1, %c0_i32 : i32, i32, i32
  }
  func.func @transform_2(%arg0: i32, %arg1: i32, %arg2: i32) -> (i32, i32, i32, i32) {
    %c0_i32 = arith.constant 0 : i32
    %c0_i32_0 = arith.constant 0 : i32
    %c0_i32_1 = arith.constant 0 : i32
    return %arg0, %arg1, %c0_i32, %c0_i32_0 : i32, i32, i32, i32
  }
  func.func @transform_3(%arg0: i32, %arg1: i32, %arg2: i32) -> (i32, i32, i32, i32) {
    %c0_i32 = arith.constant 0 : i32
    %c0_i32_0 = arith.constant 0 : i32
    %c0_i32_1 = arith.constant 0 : i32
    return %arg0, %arg1, %c0_i32, %c0_i32_0 : i32, i32, i32, i32
  }
}

</mosaic_0001>

<llo_original>
// kernel: tpu_custom_call.1
$region0: #{tpu_custom_call.1}
  #allocation0 [shape = 'u32[]', space=smem, size = 0x4, offset = 0x4, fixed_abs, tag = 'smem constant byte address 0x4 - core index']
  #allocation1 [shape = 'u32[144,128]{1,0:T(1,128)}', space=vmem, size = 0x12000, scoped, tag = 'internal scratch']
  #allocation2 [shape = 'f32[2,128]{1,0:T(2,128)}', space=vmem, size = 0x400, scoped, tag = 'scratch operand']
  #allocation3 [shape = 'f32[2,128]{1,0:T(2,128)}', space=vmem, size = 0x400, scoped, tag = 'scratch operand']
  %s0 = inlined_call_operand.hbm [shape: f32[2,8,128], index: 0, kind: input, shape index: {}]
  %s1 = inlined_call_operand.hbm [shape: f32[2,8,128], index: 1, kind: input, shape index: {}]
  %s2 = inlined_call_operand.hbm [shape: f32[1,1,2,128], index: 2, kind: output, shape index: {0}]
  %s3 = inlined_call_operand.hbm [shape: f32[1,1,2,128], index: 3, kind: output, shape index: {1}]
  %4 = xla_tuple %s2, %s3
  %s5 = sld [smem:[#allocation0]]
  $region42: #{tpu_custom_call.1} parent=0
    _
  %s7 = ssub.s32 1, %s5
  %s8 = scalar_select 0, %s7, %s5
  $region1: #{tpu_custom_call.1} parent=0
    #allocation4 [shape = 'u8[8192]{0}', space=vmem, size = 0x2000, scoped, tag = 'input window, operand 0, single buffered']
    #allocation5 [shape = 's32[1]{0}', space=sflag, size = 0x4, scoped, tag = 'scoped memory for tpu_custom_call.1']
    #allocation6 [shape = 's32[1]{0}', space=sflag, size = 0x4, scoped, tag = 'scoped memory for tpu_custom_call.1']
    #allocation7 [shape = 'u8[8192]{0}', space=vmem, size = 0x2000, scoped, tag = 'input window, operand 1, single buffered']
    #allocation8 [shape = 's32[1]{0}', space=sflag, size = 0x4, scoped, tag = 'scoped memory for tpu_custom_call.1']
    #allocation9 [shape = 'u8[1024]{0}', space=vmem, size = 0x400, scoped, tag = 'output window, operand 0, single buffered']
    #allocation10 [shape = 'u8[1024]{0}', space=vmem, size = 0x400, scoped, tag = 'output window, operand 1, single buffered']
    #allocation11 [shape = 's32[1]{0}', space=sflag, size = 0x4, scoped, tag = 'scoped memory for tpu_custom_call.1']
    %9 = vsyncpa [#allocation5], 0
    %10 = vsyncpa [#allocation8], 0
    %11 = vsyncpa [#allocation6], 0
    %12 = vsyncpa [#allocation11], 0
    // Predicated region
    $region2: #{tpu_custom_call.1} parent=1 // pred_check
      _
    $region3: #{tpu_custom_call.1} parent=1 // pred_check_branch
      %14 = sbr.rel (0) target = $region5
    $region4: #{tpu_custom_call.1} parent=1 // pred_region
      %s15 = sadd.s32 0, 0
      %s17 = ssub.s32 256, 256
      %18 = vsyncadd [#allocation5], %s17
      %s19 = smul.addr %s15, 128
      %s20 = scalar_lea.hbm %s0, %s19
      %s21 = sshll.u32 [#allocation4], 4
      %s22 = int_to_ptr.vmem [resolvable:$true] %s21
      %27 = dma.hbm_to_vmem [thread:$0]  %s20, 256, %s22, [#allocation5], 128, 128, 8
    $region5: #{tpu_custom_call.1} parent=1 // pred_fallthru
      _
    // Predicated region
    $region6: #{tpu_custom_call.1} parent=1 // pred_check
      _
    $region7: #{tpu_custom_call.1} parent=1 // pred_check_branch
      %29 = sbr.rel (0) target = $region9
    $region8: #{tpu_custom_call.1} parent=1 // pred_region
      %s30 = sadd.s32 0, 0
      %s32 = ssub.s32 256, 256
      %33 = vsyncadd [#allocation8], %s32
      %s34 = smul.addr %s30, 128
      %s35 = scalar_lea.hbm %s1, %s34
      %s36 = sshll.u32 [#allocation7], 4
      %s37 = int_to_ptr.vmem [resolvable:$true] %s36
      %42 = dma.hbm_to_vmem [thread:$0]  %s35, 256, %s37, [#allocation8], 128, 128, 8
    $region9: #{tpu_custom_call.1} parent=1 // pred_fallthru
      _
    // Predicated region
    $region10: #{tpu_custom_call.1} parent=1 // pred_check
      _
    $region11: #{tpu_custom_call.1} parent=1 // pred_check_branch
      %44 = sbr.rel (0) target = $region13
    $region12: #{tpu_custom_call.1} parent=1 // pred_region
      %45 = dma.done [#allocation5], 256
    $region13: #{tpu_custom_call.1} parent=1 // pred_fallthru
      _
    // Predicated region
    $region14: #{tpu_custom_call.1} parent=1 // pred_check
      _
    $region15: #{tpu_custom_call.1} parent=1 // pred_check_branch
      %47 = sbr.rel (0) target = $region17
    $region16: #{tpu_custom_call.1} parent=1 // pred_region
      %48 = dma.done [#allocation8], 256
    $region17: #{tpu_custom_call.1} parent=1 // pred_fallthru
      _
    %s49 = sadd.s32 0, 0
    %s50 = sadd.s32 0, 0
    %p51 = scmp.eq.s32.totalorder 0, 0
    // Predicated region
    $region18: #{tpu_custom_call.1} parent=1 // pred_check
      %p52 = pneg %p51
    $region19: #{tpu_custom_call.1} parent=1 // pred_check_branch
      %54 = sbr.rel (%p52) target = $region21
    $region20: #{tpu_custom_call.1} parent=1 // pred_region
      %55 = vst [vmem:[#allocation2] sm:$0x3] 0.0
      %56 = vst [vmem:[#allocation3] sm:$0x3] 0.0
    $region21: #{tpu_custom_call.1} parent=1 // pred_fallthru
      _
    %v57 = vld [vmem:[#allocation4] sm:$0xff]
    %v58 = vld [vmem:[#allocation4 + $0x8] sm:$0xff]
    %v59 = vld [vmem:[#allocation7] sm:$0xff]
    %v60 = vld [vmem:[#allocation7 + $0x8] sm:$0xff]
    %v61 = vmul.f32 %v57, %v59
    %v62 = vmul.f32 %v58, %v60
    %v63 = vadd.f32 %v57, %v59
    %v64 = vadd.f32 %v58, %v60
    %v65 = vld [vmem:[#allocation2] sm:$0x3]
    %v66 = vrot.slane %v61, 4
    %v67 = vadd.f32 %v61, %v66
    %v68 = vrot.slane %v67, 2
    %v69 = vadd.f32 %v67, %v68
    %v70 = vrot.slane %v69, 1
    %v71 = vadd.f32 %v69, %v70
    %v72 = vrot.slane %v62, 4
    %v73 = vadd.f32 %v62, %v72
    %v74 = vrot.slane %v73, 2
    %v75 = vadd.f32 %v73, %v74
    %v76 = vrot.slane %v75, 1
    %v77 = vadd.f32 %v75, %v76
    %vm80 = vcmask 1041409
    %v81 = vsel %vm80, %v77, %v71
    %v83 = vadd.f32 %v65, %v81
    %84 = vst [vmem:[#allocation2] sm:$0x3] %v83
    %v85 = vld [vmem:[#allocation3] sm:$0x3]
    %v86 = vrot.slane %v63, 4
    %v87 = vadd.f32 %v63, %v86
    %v88 = vrot.slane %v87, 2
    %v89 = vadd.f32 %v87, %v88
    %v90 = vrot.slane %v89, 1
    %v91 = vadd.f32 %v89, %v90
    %v92 = vrot.slane %v64, 4
    %v93 = vadd.f32 %v64, %v92
    %v94 = vrot.slane %v93, 2
    %v95 = vadd.f32 %v93, %v94
    %v96 = vrot.slane %v95, 1
    %v97 = vadd.f32 %v95, %v96
    %v100 = vsel %vm80, %v97, %v91
    %v102 = vadd.f32 %v85, %v100
    %103 = vst [vmem:[#allocation3] sm:$0x3] %v102
    // Predicated region
    $region22: #{tpu_custom_call.1} parent=1 // pred_check
      %p104 = pneg %p51
    $region23: #{tpu_custom_call.1} parent=1 // pred_check_branch
      %106 = sbr.rel (%p104) target = $region25
    $region24: #{tpu_custom_call.1} parent=1 // pred_region
      %v107 = vld [vmem:[#allocation2] sm:$0x3]
      %108 = vst [vmem:[#allocation9] sm:$0x3] %v107
      %v109 = vld [vmem:[#allocation3] sm:$0x3]
      %110 = vst [vmem:[#allocation10] sm:$0x3] %v109
    $region25: #{tpu_custom_call.1} parent=1 // pred_fallthru
      _
    // Predicated region
    $region26: #{tpu_custom_call.1} parent=1 // pred_check
      _
    $region27: #{tpu_custom_call.1} parent=1 // pred_check_branch
      %112 = sbr.rel (0) target = $region29
    $region28: #{tpu_custom_call.1} parent=1 // pred_region
      %s114 = ssub.s32 32, 32
      %115 = vsyncadd [#allocation6], %s114
      %s117 = sshll.u32 [#allocation9], 4
      %s118 = int_to_ptr.vmem [resolvable:$true] %s117
      %120 = dma.vmem_to_hbm [thread:$0]  %s118, 32, %s2, [#allocation6]
    $region29: #{tpu_custom_call.1} parent=1 // pred_fallthru
      _
    // Predicated region
    $region30: #{tpu_custom_call.1} parent=1 // pred_check
      _
    $region31: #{tpu_custom_call.1} parent=1 // pred_check_branch
      %122 = sbr.rel (0) target = $region33
    $region32: #{tpu_custom_call.1} parent=1 // pred_region
      %s124 = ssub.s32 32, 32
      %125 = vsyncadd [#allocation11], %s124
      %s127 = sshll.u32 [#allocation10], 4
      %s128 = int_to_ptr.vmem [resolvable:$true] %s127
      %130 = dma.vmem_to_hbm [thread:$0]  %s128, 32, %s3, [#allocation11]
    $region33: #{tpu_custom_call.1} parent=1 // pred_fallthru
      _
    // Predicated region
    $region34: #{tpu_custom_call.1} parent=1 // pred_check
      _
    $region35: #{tpu_custom_call.1} parent=1 // pred_check_branch
      %132 = sbr.rel (0) target = $region37
    $region36: #{tpu_custom_call.1} parent=1 // pred_region
      %133 = dma.done [#allocation6], 32
    $region37: #{tpu_custom_call.1} parent=1 // pred_fallthru
      _
    // Predicated region
    $region38: #{tpu_custom_call.1} parent=1 // pred_check
      _
    $region39: #{tpu_custom_call.1} parent=1 // pred_check_branch
      %135 = sbr.rel (0) target = $region41
    $region40: #{tpu_custom_call.1} parent=1 // pred_region
      %136 = dma.done [#allocation11], 32
    $region41: #{tpu_custom_call.1} parent=1 // pred_fallthru
      _
    %137 = vsyncpa [#allocation5], 1
    %138 = vsyncpa [#allocation8], 1
    %139 = vsyncpa [#allocation6], 1
    %140 = vsyncpa [#allocation11], 1

</llo_original>
